<compile_context>
chip_gen: v6e
topology: v6e:2x2x1
jax: 0.10.0
libtpu: 0.0.40
codegen_flags: <defaults>
</compile_context>

<pallas_src>
import functools

import jax
import jax.numpy as jnp
from jax import lax
from jax.experimental import pallas as pl
from jax.experimental.pallas import tpu as pltpu


def _round_up(x, m):
    return ((x + m - 1) // m) * m


def _vmem_limit_bytes():
    """Generation-aware scoped-VMEM limit (conservative default)."""
    try:
        kind = jax.devices()[0].device_kind.lower()
    except Exception:
        kind = ""
    if "v5" in kind or "v6" in kind:
        return 96 * 1024 * 1024      # 128 MiB physical on v5e/v6e
    return 48 * 1024 * 1024          # v7x has only 64 MiB physical


def _attend_rows(adst_rows, asrc_all, mask_rows, haug_all):
    """Masked-softmax attention + aggregation for one tile of target rows.

    adst_rows: (tm, 1) f32   per-target scores  <h_i, att_dst>
    asrc_all : (1,  N) f32   per-source scores  <h_j, att_src>
    mask_rows: (tm, N) bf16  additive edge mask (0 / -1e30)
    haug_all : (N,  F) bf16  transformed features (+ folded score column)
    returns  : (tm, F) f32   sum_j softmax_j(LeakyReLU(e_ij) + mask) * haug_j
    """
    logits = adst_rows + asrc_all                       # (tm, N) f32
    logits = jnp.maximum(logits, 0.2 * logits)          # LeakyReLU(0.2)
    logits = logits + mask_rows                         # bf16 mask, f32 add
    m = jnp.max(logits, axis=-1, keepdims=True)
    p = jnp.exp(logits - m)
    inv = pl.reciprocal(jnp.sum(p, axis=-1, keepdims=True), approx=True)
    alpha = (p * inv).astype(jnp.bfloat16)
    return jnp.dot(alpha, haug_all, preferred_element_type=jnp.float32)


def _gat_fused_kernel(x_ref, w1_ref, s1_ref, w2_ref, s2_ref, b2_ref, mb_ref,
                      out_ref, h1a_ref, h2a_ref, asrc2_ref):
    """conv1 -> ReLU -> conv2 fused; layer-1 activations never leave VMEM."""
    i = pl.program_id(0)
    tm, o_pad = out_ref.shape
    n = mb_ref.shape[0]
    h_pad = h1a_ref.shape[1]
    n_tiles = n // tm

    # --- step 0: layer 1 for ALL nodes + layer-2 transform, into scratch ---
    @pl.when(i == 0)
    def _():
        x_all = x_ref[...]                                      # (n, fin) bf16
        # H1_aug = [x@W1 + b1 | 0 pad | a_dst1]; bias1 folded via ones column.
        h1a_ref[...] = jnp.dot(
            x_all, w1_ref[...],
            preferred_element_type=jnp.float32).astype(jnp.bfloat16)
        # Per-source scores contracted against the raw input (bias-free).
        asrc1 = lax.dot_general(
            s1_ref[...], x_all, (((1,), (1,)), ((), ())),
            preferred_element_type=jnp.float32)                 # (1, n) f32

        def l1_tile(t, carry):
            r0 = pl.multiple_of(t * tm, tm)
            adst1 = h1a_ref[pl.ds(r0, tm), h_pad - 1:h_pad].astype(jnp.float32)
            h1_rows = _attend_rows(adst1, asrc1,
                                   mb_ref[pl.ds(r0, tm), :], h1a_ref[...])
            h1_rows = jnp.maximum(h1_rows, 0.0).astype(jnp.bfloat16)   # ReLU
            # H2_aug rows = ReLU(h1_rows) @ [W2 | 0 pad | W2 @ att_dst2^T];
            # layer-1 junk columns hit zero rows of w2a by construction.
            h2a_ref[pl.ds(r0, tm), :] = jnp.dot(
                h1_rows, w2_ref[...],
                preferred_element_type=jnp.float32).astype(jnp.bfloat16)
            return carry

        lax.fori_loop(0, n_tiles, l1_tile, 0, unroll=(n_tiles <= 8))

        # Layer-2 per-source scores (junk a_dst2 column hits zeros in s2).
        asrc2_ref[...] = lax.dot_general(
            s2_ref[...], h2a_ref[...], (((1,), (1,)), ((), ())),
            preferred_element_type=jnp.float32)                 # (1, n) f32

    # --- every step: layer 2 for this step's tile of target rows -----------
    r0 = pl.multiple_of(i * tm, tm)
    adst2 = h2a_ref[pl.ds(r0, tm), o_pad - 1:o_pad].astype(jnp.float32)
    out2 = _attend_rows(adst2, asrc2_ref[...],
                        mb_ref[pl.ds(r0, tm), :], h2a_ref[...])
    out_ref[...] = out2 + b2_ref[...]


def _prep_operands(x, params):
    """Pad + fold attention / bias into augmented bf16 weight matrices."""
    (w1, as1, ad1, b1), (w2, as2, ad2, b2) = params
    n, fin = x.shape
    hid = w1.shape[1]
    fout = w2.shape[1]
    fin_pad = _round_up(fin + 1, 128)   # +1: ones column (folded bias1)
    h_pad = _round_up(hid + 1, 128)     # +1: folded a_dst1 score column
    o_pad = _round_up(fout + 1, 128)    # +1: folded a_dst2 score column

    # Node features, padded, plus a ones column that carries the bias row.
    x_aug = jnp.zeros((n, fin_pad), jnp.float32)
    x_aug = x_aug.at[:, :fin].set(x).at[:, fin].set(1.0)

    # Layer 1: W1 block, bias row under the ones column, a_dst1 column last.
    w1a = jnp.zeros((fin_pad, h_pad), jnp.float32)
    w1a = w1a.at[:fin, :hid].set(w1)
    w1a = w1a.at[fin, :hid].set(b1.reshape(hid))
    w1a = w1a.at[:fin, h_pad - 1].set((w1 @ ad1.reshape(hid, 1))[:, 0])
    # att_src1 projected to input space: a_src1[j] = <x_j, W1 att_src1^T>
    # = <h_j, att_src1>, so the folded bias never reaches the logits.
    s1w = jnp.zeros((1, fin_pad), jnp.float32)
    s1w = s1w.at[0, :fin].set((as1.reshape(1, hid) @ w1.T)[0])

    # Layer 2: W2 block + a_dst2 column (bias2 added explicitly post-agg).
    w2a = jnp.zeros((h_pad, o_pad), jnp.float32)
    w2a = w2a.at[:hid, :fout].set(w2)
    w2a = w2a.at[:hid, o_pad - 1].set((w2 @ ad2.reshape(fout, 1))[:, 0])
    s2p = jnp.zeros((1, o_pad), jnp.float32).at[0, :fout].set(as2.reshape(fout))
    b2p = jnp.zeros((1, o_pad), jnp.float32).at[0, :fout].set(b2.reshape(fout))

    bf = jnp.bfloat16
    return (x_aug.astype(bf), w1a.astype(bf), s1w.astype(bf),
            w2a.astype(bf), s2p.astype(bf), b2p, o_pad, fout)


@functools.partial(jax.jit, static_argnames=("tm",))
def gat_forward(x, adj, params, tm=8):
    """GAT.forward: conv1 -> ReLU -> conv2, one fused Pallas kernel."""
    n = x.shape[0]
    assert n % tm == 0 and tm % 8 == 0, "target tile must divide N, align to 8"

    x_aug, w1a, s1w, w2a, s2p, b2p, o_pad, fout = _prep_operands(x, params)
    fin_pad = x_aug.shape[1]
    h_pad = w1a.shape[1]

    # Additive edge mask over adj[target, source]; bf16 halves the only
    # O(N^2) operand.  TODO(synk): int8 {0,1} mask variant for v5e.
    mask_bias = jnp.where(adj > 0, 0.0, -1e30).astype(jnp.bfloat16)

    out_pad = pl.pallas_call(
        _gat_fused_kernel,
        out_shape=jax.ShapeDtypeStruct((n, o_pad), jnp.float32),
        grid_spec=pltpu.PrefetchScalarGridSpec(
            num_scalar_prefetch=0,
            grid=(n // tm,),
            in_specs=[
                pl.BlockSpec((n, fin_pad), lambda i: (0, 0)),     # x (+ones)
                pl.BlockSpec((fin_pad, h_pad), lambda i: (0, 0)),  # W1_aug
                pl.BlockSpec((1, fin_pad), lambda i: (0, 0)),     # att_src1*W1
                pl.BlockSpec((h_pad, o_pad), lambda i: (0, 0)),   # W2_aug
                pl.BlockSpec((1, o_pad), lambda i: (0, 0)),       # att_src2
                pl.BlockSpec((1, o_pad), lambda i: (0, 0)),       # bias2
                pl.BlockSpec((n, n), lambda i: (0, 0)),           # mask bias
            ],
            out_specs=pl.BlockSpec((tm, o_pad), lambda i: (i, 0)),
            scratch_shapes=[
                pltpu.VMEM((n, h_pad), jnp.bfloat16),   # H1_aug, all nodes
                pltpu.VMEM((n, o_pad), jnp.bfloat16),   # H2_aug, all nodes
                pltpu.VMEM((1, n), jnp.float32),        # a_src2 row
            ]),
        compiler_params=pltpu.CompilerParams(
            # Step-0 scratch is read by later steps => this axis cannot be
            # "parallel".  TODO(synk): v7x 2-TC split of the target axis.
            dimension_semantics=("arbitrary",),
            vmem_limit_bytes=_vmem_limit_bytes()),
    )(x_aug, w1a, s1w, w2a, s2p, b2p, mask_bias)

    return out_pad[:, :fout]


def _ref_gatconv(x, w, a_s, a_d, b, adj, relu):
    """Pure-JAX dense f32 reference for correctness checking."""
    h = x @ w
    s = (h * a_s).sum(-1)
    d = (h * a_d).sum(-1)
    logits = d[:, None] + s[None, :]
    logits = jnp.where(logits > 0, logits, 0.2 * logits)
    logits = jnp.where(adj > 0, logits, -jnp.inf)
    alpha = jax.nn.softmax(logits, axis=-1)
    o = alpha @ h + b
    return jnp.maximum(o, 0.0) if relu else o


if __name__ == "__main__":
    key = jax.random.PRNGKey(0)
    N, input_dim, hidden_dim, output_dim, E = 16, 8, 16, 8, 40
    keys = jax.random.split(key, 8)

    # Deterministic inputs: node features + random edge list.
    x = jax.random.normal(keys[0], (N, input_dim), jnp.float32)
    src = jax.random.randint(keys[1], (E,), 0, N)
    dst = jax.random.randint(keys[2], (E,), 0, N)
    edge_index = jnp.stack([src, dst])                       # [2, E]

    # Dense adjacency mask adj[target, source], self-loops added
    # (matches torch_geometric GATConv(add_self_loops=True)).
    adj = jnp.zeros((N, N), jnp.float32).at[edge_index[1], edge_index[0]].set(1.0)
    adj = jnp.maximum(adj, jnp.eye(N, dtype=jnp.float32))

    def init_layer(k, fin, fout):
        k1, k2, k3, k4 = jax.random.split(k, 4)
        w = jax.random.normal(k1, (fin, fout), jnp.float32) / jnp.sqrt(float(fin))
        a_src = jax.random.normal(k2, (1, fout), jnp.float32) * 0.1
        a_dst = jax.random.normal(k3, (1, fout), jnp.float32) * 0.1
        b = jax.random.normal(k4, (1, fout), jnp.float32) * 0.1
        return w, a_src, a_dst, b

    params = (init_layer(keys[3], input_dim, hidden_dim),
              init_layer(keys[4], hidden_dim, output_dim))

    out = jax.block_until_ready(gat_forward(x, adj, params, tm=8))

    (w1, as1, ad1, b1), (w2, as2, ad2, b2) = params
    r = _ref_gatconv(x, w1, as1, ad1, b1, adj, True)
    r = _ref_gatconv(r, w2, as2, ad2, b2, adj, False)
    assert out.shape == (N, output_dim)
    # Error budget vs. the f32 reference: bf16 operands (2^-9 rounding) on
    # every matmul, bf16-resident H_aug scratch, and the approx reciprocal
    # (bf16 outside Mosaic, 2^-12 on HW) compound over two layers ->
    # worst-case ~1e-2..2e-2 abs on O(1) outputs; 5e-2 keeps margin while
    # still catching any semantic error (those are O(0.3-1)).
    assert jnp.allclose(out, r, atol=5e-2, rtol=5e-2), "Pallas vs JAX mismatch"

    print("KERNEL_OK")
</pallas_src>

<mosaic_0001>
module attributes {stable_mosaic.version = 11 : i64} {
  func.func @_gat_fused_kernel(%arg0: i32, %arg1: memref<16x128xbf16, #tpu.memory_space<vmem>>, %arg2: memref<128x128xbf16, #tpu.memory_space<vmem>>, %arg3: memref<1x128xbf16, #tpu.memory_space<vmem>>, %arg4: memref<128x128xbf16, #tpu.memory_space<vmem>>, %arg5: memref<1x128xbf16, #tpu.memory_space<vmem>>, %arg6: memref<1x128xf32, #tpu.memory_space<vmem>>, %arg7: memref<16x16xbf16, #tpu.memory_space<vmem>>, %arg8: memref<8x128xf32, #tpu.memory_space<vmem>>, %arg9: memref<16x128xbf16, #tpu.memory_space<vmem>>, %arg10: memref<16x128xbf16, #tpu.memory_space<vmem>>, %arg11: memref<1x16xf32, #tpu.memory_space<vmem>>) attributes {dimension_semantics = [#tpu.dimension_semantics<arbitrary>], iteration_bounds = array<i64: 2>, scalar_prefetch = 0 : i64, scratch_operands = 3 : i64, tpu.core_type = #tpu.core_type<tc>, window_params = [{pipeline_mode = #tpu.pipeline_mode<synchronous>, transform_indices = @transform_0, window_bounds = array<i64: 16, 128>}, {pipeline_mode = #tpu.pipeline_mode<synchronous>, transform_indices = @transform_1, window_bounds = array<i64: 128, 128>}, {pipeline_mode = #tpu.pipeline_mode<synchronous>, transform_indices = @transform_2, window_bounds = array<i64: 1, 128>}, {pipeline_mode = #tpu.pipeline_mode<synchronous>, transform_indices = @transform_3, window_bounds = array<i64: 128, 128>}, {pipeline_mode = #tpu.pipeline_mode<synchronous>, transform_indices = @transform_4, window_bounds = array<i64: 1, 128>}, {pipeline_mode = #tpu.pipeline_mode<synchronous>, transform_indices = @transform_5, window_bounds = array<i64: 1, 128>}, {pipeline_mode = #tpu.pipeline_mode<synchronous>, transform_indices = @transform_6, window_bounds = array<i64: 16, 16>}, {transform_indices = @transform_7, window_bounds = array<i64: 8, 128>}]} {
    %c0_i32 = arith.constant 0 : i32
    %0 = arith.cmpi eq, %arg0, %c0_i32 : i32
    %1 = arith.extui %0 : i1 to i32
    %c0_i32_0 = arith.constant 0 : i32
    %2 = arith.cmpi ne, %1, %c0_i32_0 : i32
    scf.if %2 {
      %c0_12 = arith.constant 0 : index
      %c0_13 = arith.constant 0 : index
      %36 = vector.load %arg1[%c0_12, %c0_13] : memref<16x128xbf16, #tpu.memory_space<vmem>>, vector<16x128xbf16>
      %c0_14 = arith.constant 0 : index
      %c0_15 = arith.constant 0 : index
      %37 = vector.load %arg2[%c0_14, %c0_15] : memref<128x128xbf16, #tpu.memory_space<vmem>>, vector<128x128xbf16>
      %cst_16 = arith.constant dense<0.000000e+00> : vector<16x128xf32>
      %38 = tpu.matmul %36, %37, %cst_16 {dimension_numbers = #tpu.dot_dimension_numbers<[1], [0], [0], [1], [0, 0, 1, 1], [], []>} : vector<16x128xbf16>, vector<128x128xbf16>, vector<16x128xf32> -> vector<16x128xf32>
      %39 = arith.truncf %38 : vector<16x128xf32> to vector<16x128xbf16>
      %c0_17 = arith.constant 0 : index
      %c0_18 = arith.constant 0 : index
      %40 = vector.load %arg9[%c0_17, %c0_18] : memref<16x128xbf16, #tpu.memory_space<vmem>>, vector<16x128xbf16>
      tpu.vector_store %arg9[%c0_17, %c0_18], %39 {strides = array<i32>} : memref<16x128xbf16, #tpu.memory_space<vmem>>, vector<16x128xbf16>,
      %c0_19 = arith.constant 0 : index
      %c0_20 = arith.constant 0 : index
      %41 = vector.load %arg3[%c0_19, %c0_20] : memref<1x128xbf16, #tpu.memory_space<vmem>>, vector<1x128xbf16>
      %cst_21 = arith.constant dense<0.000000e+00> : vector<1x16xf32>
      %42 = tpu.matmul %41, %36, %cst_21 {dimension_numbers = #tpu.dot_dimension_numbers<[1], [1], [0], [0], [0, 0, 1, 0], [], []>} : vector<1x128xbf16>, vector<16x128xbf16>, vector<1x16xf32> -> vector<1x16xf32>
      %c0_i32_22 = arith.constant 0 : i32
      %c8_i32_23 = arith.constant 8 : i32
      %43 = arith.muli %c0_i32_22, %c8_i32_23 : i32
      %44 = tpu.assume_multiple %43, 8 : i32
      %45 = arith.index_cast %44 : i32 to index
      %c127_24 = arith.constant 127 : index
      %46 = vector.load %arg9[%45, %c127_24] : memref<16x128xbf16, #tpu.memory_space<vmem>>, vector<8x1xbf16>
      %47 = arith.extf %46 : vector<8x1xbf16> to vector<8x1xf32>
      %48 = arith.index_cast %44 : i32 to index
      %c0_25 = arith.constant 0 : index
      %49 = vector.load %arg7[%48, %c0_25] : memref<16x16xbf16, #tpu.memory_space<vmem>>, vector<8x16xbf16>
      %c0_26 = arith.constant 0 : index
      %c0_27 = arith.constant 0 : index
      %50 = vector.load %arg9[%c0_26, %c0_27] : memref<16x128xbf16, #tpu.memory_space<vmem>>, vector<16x128xbf16>
      %51 = vector.broadcast %47 : vector<8x1xf32> to vector<8x16xf32>
      %52 = vector.broadcast %42 : vector<1x16xf32> to vector<8x16xf32>
      %53 = arith.addf %51, %52 : vector<8x16xf32>
      %cst_28 = arith.constant 2.000000e-01 : f32
      %54 = vector.broadcast %cst_28 : f32 to vector<8x16xf32>
      %55 = arith.mulf %54, %53 : vector<8x16xf32>
      %56 = arith.maximumf %53, %55 : vector<8x16xf32>
      %57 = arith.extf %49 : vector<8x16xbf16> to vector<8x16xf32>
      %58 = arith.addf %56, %57 : vector<8x16xf32>
      %cst_29 = arith.constant dense<0xFF800000> : vector<8xf32>
      %59 = vector.multi_reduction <maximumf>, %58, %cst_29 [1] : vector<8x16xf32> to vector<8xf32>
      %60 = vector.shape_cast %59 : vector<8xf32> to vector<8x1xf32>
      %61 = vector.broadcast %60 : vector<8x1xf32> to vector<8x16xf32>
      %62 = arith.subf %58, %61 : vector<8x16xf32>
      %63 = math.exp %62 : vector<8x16xf32>
      %cst_30 = arith.constant dense<0.000000e+00> : vector<8xf32>
      %64 = vector.multi_reduction <add>, %63, %cst_30 [1] : vector<8x16xf32> to vector<8xf32>
      %65 = vector.shape_cast %64 : vector<8xf32> to vector<8x1xf32>
      %66 = tpu.reciprocal %65 {approx = true} : vector<8x1xf32> -> vector<8x1xf32>
      %67 = vector.broadcast %66 : vector<8x1xf32> to vector<8x16xf32>
      %68 = arith.mulf %63, %67 : vector<8x16xf32>
      %69 = arith.truncf %68 : vector<8x16xf32> to vector<8x16xbf16>
      %cst_31 = arith.constant dense<0.000000e+00> : vector<8x128xf32>
      %70 = tpu.matmul %69, %50, %cst_31 {dimension_numbers = #tpu.dot_dimension_numbers<[1], [0], [0], [1], [0, 0, 1, 1], [], []>} : vector<8x16xbf16>, vector<16x128xbf16>, vector<8x128xf32> -> vector<8x128xf32>
      %cst_32 = arith.constant 0.000000e+00 : f32
      %71 = vector.broadcast %cst_32 : f32 to vector<8x128xf32>
      %72 = arith.maximumf %70, %71 : vector<8x128xf32>
      %73 = arith.truncf %72 : vector<8x128xf32> to vector<8x128xbf16>
      %c0_33 = arith.constant 0 : index
      %c0_34 = arith.constant 0 : index
      %74 = vector.load %arg4[%c0_33, %c0_34] : memref<128x128xbf16, #tpu.memory_space<vmem>>, vector<128x128xbf16>
      %cst_35 = arith.constant dense<0.000000e+00> : vector<8x128xf32>
      %75 = tpu.matmul %73, %74, %cst_35 {dimension_numbers = #tpu.dot_dimension_numbers<[1], [0], [0], [1], [0, 0, 1, 1], [], []>} : vector<8x128xbf16>, vector<128x128xbf16>, vector<8x128xf32> -> vector<8x128xf32>
      %76 = arith.truncf %75 : vector<8x128xf32> to vector<8x128xbf16>
      %77 = arith.index_cast %44 : i32 to index
      %c0_36 = arith.constant 0 : index
      %78 = vector.load %arg10[%77, %c0_36] : memref<16x128xbf16, #tpu.memory_space<vmem>>, vector<8x128xbf16>
      tpu.vector_store %arg10[%77, %c0_36], %76 {strides = array<i32>} : memref<16x128xbf16, #tpu.memory_space<vmem>>, vector<8x128xbf16>,
      %c1_i32 = arith.constant 1 : i32
      %c8_i32_37 = arith.constant 8 : i32
      %79 = arith.muli %c1_i32, %c8_i32_37 : i32
      %80 = tpu.assume_multiple %79, 8 : i32
      %81 = arith.index_cast %80 : i32 to index
      %c127_38 = arith.constant 127 : index
      %82 = vector.load %arg9[%81, %c127_38] : memref<16x128xbf16, #tpu.memory_space<vmem>>, vector<8x1xbf16>
      %83 = arith.extf %82 : vector<8x1xbf16> to vector<8x1xf32>
      %84 = arith.index_cast %80 : i32 to index
      %c0_39 = arith.constant 0 : index
      %85 = vector.load %arg7[%84, %c0_39] : memref<16x16xbf16, #tpu.memory_space<vmem>>, vector<8x16xbf16>
      %c0_40 = arith.constant 0 : index
      %c0_41 = arith.constant 0 : index
      %86 = vector.load %arg9[%c0_40, %c0_41] : memref<16x128xbf16, #tpu.memory_space<vmem>>, vector<16x128xbf16>
      %87 = vector.broadcast %83 : vector<8x1xf32> to vector<8x16xf32>
      %88 = vector.broadcast %42 : vector<1x16xf32> to vector<8x16xf32>
      %89 = arith.addf %87, %88 : vector<8x16xf32>
      %cst_42 = arith.constant 2.000000e-01 : f32
      %90 = vector.broadcast %cst_42 : f32 to vector<8x16xf32>
      %91 = arith.mulf %90, %89 : vector<8x16xf32>
      %92 = arith.maximumf %89, %91 : vector<8x16xf32>
      %93 = arith.extf %85 : vector<8x16xbf16> to vector<8x16xf32>
      %94 = arith.addf %92, %93 : vector<8x16xf32>
      %cst_43 = arith.constant dense<0xFF800000> : vector<8xf32>
      %95 = vector.multi_reduction <maximumf>, %94, %cst_43 [1] : vector<8x16xf32> to vector<8xf32>
      %96 = vector.shape_cast %95 : vector<8xf32> to vector<8x1xf32>
      %97 = vector.broadcast %96 : vector<8x1xf32> to vector<8x16xf32>
      %98 = arith.subf %94, %97 : vector<8x16xf32>
      %99 = math.exp %98 : vector<8x16xf32>
      %cst_44 = arith.constant dense<0.000000e+00> : vector<8xf32>
      %100 = vector.multi_reduction <add>, %99, %cst_44 [1] : vector<8x16xf32> to vector<8xf32>
      %101 = vector.shape_cast %100 : vector<8xf32> to vector<8x1xf32>
      %102 = tpu.reciprocal %101 {approx = true} : vector<8x1xf32> -> vector<8x1xf32>
      %103 = vector.broadcast %102 : vector<8x1xf32> to vector<8x16xf32>
      %104 = arith.mulf %99, %103 : vector<8x16xf32>
      %105 = arith.truncf %104 : vector<8x16xf32> to vector<8x16xbf16>
      %cst_45 = arith.constant dense<0.000000e+00> : vector<8x128xf32>
      %106 = tpu.matmul %105, %86, %cst_45 {dimension_numbers = #tpu.dot_dimension_numbers<[1], [0], [0], [1], [0, 0, 1, 1], [], []>} : vector<8x16xbf16>, vector<16x128xbf16>, vector<8x128xf32> -> vector<8x128xf32>
      %cst_46 = arith.constant 0.000000e+00 : f32
      %107 = vector.broadcast %cst_46 : f32 to vector<8x128xf32>
      %108 = arith.maximumf %106, %107 : vector<8x128xf32>
      %109 = arith.truncf %108 : vector<8x128xf32> to vector<8x128xbf16>
      %c0_47 = arith.constant 0 : index
      %c0_48 = arith.constant 0 : index
      %110 = vector.load %arg4[%c0_47, %c0_48] : memref<128x128xbf16, #tpu.memory_space<vmem>>, vector<128x128xbf16>
      %cst_49 = arith.constant dense<0.000000e+00> : vector<8x128xf32>
      %111 = tpu.matmul %109, %110, %cst_49 {dimension_numbers = #tpu.dot_dimension_numbers<[1], [0], [0], [1], [0, 0, 1, 1], [], []>} : vector<8x128xbf16>, vector<128x128xbf16>, vector<8x128xf32> -> vector<8x128xf32>
      %112 = arith.truncf %111 : vector<8x128xf32> to vector<8x128xbf16>
      %113 = arith.index_cast %80 : i32 to index
      %c0_50 = arith.constant 0 : index
      %114 = vector.load %arg10[%113, %c0_50] : memref<16x128xbf16, #tpu.memory_space<vmem>>, vector<8x128xbf16>
      tpu.vector_store %arg10[%113, %c0_50], %112 {strides = array<i32>} : memref<16x128xbf16, #tpu.memory_space<vmem>>, vector<8x128xbf16>,
      %c2_i32 = arith.constant 2 : i32
      %c0_51 = arith.constant 0 : index
      %c0_52 = arith.constant 0 : index
      %115 = vector.load %arg5[%c0_51, %c0_52] : memref<1x128xbf16, #tpu.memory_space<vmem>>, vector<1x128xbf16>
      %c0_53 = arith.constant 0 : index
      %c0_54 = arith.constant 0 : index
      %116 = vector.load %arg10[%c0_53, %c0_54] : memref<16x128xbf16, #tpu.memory_space<vmem>>, vector<16x128xbf16>
      %cst_55 = arith.constant dense<0.000000e+00> : vector<1x16xf32>
      %117 = tpu.matmul %115, %116, %cst_55 {dimension_numbers = #tpu.dot_dimension_numbers<[1], [1], [0], [0], [0, 0, 1, 0], [], []>} : vector<1x128xbf16>, vector<16x128xbf16>, vector<1x16xf32> -> vector<1x16xf32>
      %c0_56 = arith.constant 0 : index
      %c0_57 = arith.constant 0 : index
      %118 = vector.load %arg11[%c0_56, %c0_57] : memref<1x16xf32, #tpu.memory_space<vmem>>, vector<1x16xf32>
      tpu.vector_store %arg11[%c0_56, %c0_57], %117 {strides = array<i32>} : memref<1x16xf32, #tpu.memory_space<vmem>>, vector<1x16xf32>,
    } else {
    }
    %c8_i32 = arith.constant 8 : i32
    %3 = arith.muli %arg0, %c8_i32 : i32
    %4 = tpu.assume_multiple %3, 8 : i32
    %5 = arith.index_cast %4 : i32 to index
    %c127 = arith.constant 127 : index
    %6 = vector.load %arg10[%5, %c127] : memref<16x128xbf16, #tpu.memory_space<vmem>>, vector<8x1xbf16>
    %7 = arith.extf %6 : vector<8x1xbf16> to vector<8x1xf32>
    %c0 = arith.constant 0 : index
    %c0_1 = arith.constant 0 : index
    %8 = vector.load %arg11[%c0, %c0_1] : memref<1x16xf32, #tpu.memory_space<vmem>>, vector<1x16xf32>
    %9 = arith.index_cast %4 : i32 to index
    %c0_2 = arith.constant 0 : index
    %10 = vector.load %arg7[%9, %c0_2] : memref<16x16xbf16, #tpu.memory_space<vmem>>, vector<8x16xbf16>
    %c0_3 = arith.constant 0 : index
    %c0_4 = arith.constant 0 : index
    %11 = vector.load %arg10[%c0_3, %c0_4] : memref<16x128xbf16, #tpu.memory_space<vmem>>, vector<16x128xbf16>
    %12 = vector.broadcast %7 : vector<8x1xf32> to vector<8x16xf32>
    %13 = vector.broadcast %8 : vector<1x16xf32> to vector<8x16xf32>
    %14 = arith.addf %12, %13 : vector<8x16xf32>
    %cst = arith.constant 2.000000e-01 : f32
    %15 = vector.broadcast %cst : f32 to vector<8x16xf32>
    %16 = arith.mulf %15, %14 : vector<8x16xf32>
    %17 = arith.maximumf %14, %16 : vector<8x16xf32>
    %18 = arith.extf %10 : vector<8x16xbf16> to vector<8x16xf32>
    %19 = arith.addf %17, %18 : vector<8x16xf32>
    %cst_5 = arith.constant dense<0xFF800000> : vector<8xf32>
    %20 = vector.multi_reduction <maximumf>, %19, %cst_5 [1] : vector<8x16xf32> to vector<8xf32>
    %21 = vector.shape_cast %20 : vector<8xf32> to vector<8x1xf32>
    %22 = vector.broadcast %21 : vector<8x1xf32> to vector<8x16xf32>
    %23 = arith.subf %19, %22 : vector<8x16xf32>
    %24 = math.exp %23 : vector<8x16xf32>
    %cst_6 = arith.constant dense<0.000000e+00> : vector<8xf32>
    %25 = vector.multi_reduction <add>, %24, %cst_6 [1] : vector<8x16xf32> to vector<8xf32>
    %26 = vector.shape_cast %25 : vector<8xf32> to vector<8x1xf32>
    %27 = tpu.reciprocal %26 {approx = true} : vector<8x1xf32> -> vector<8x1xf32>
    %28 = vector.broadcast %27 : vector<8x1xf32> to vector<8x16xf32>
    %29 = arith.mulf %24, %28 : vector<8x16xf32>
    %30 = arith.truncf %29 : vector<8x16xf32> to vector<8x16xbf16>
    %cst_7 = arith.constant dense<0.000000e+00> : vector<8x128xf32>
    %31 = tpu.matmul %30, %11, %cst_7 {dimension_numbers = #tpu.dot_dimension_numbers<[1], [0], [0], [1], [0, 0, 1, 1], [], []>} : vector<8x16xbf16>, vector<16x128xbf16>, vector<8x128xf32> -> vector<8x128xf32>
    %c0_8 = arith.constant 0 : index
    %c0_9 = arith.constant 0 : index
    %32 = vector.load %arg6[%c0_8, %c0_9] : memref<1x128xf32, #tpu.memory_space<vmem>>, vector<1x128xf32>
    %33 = vector.broadcast %32 : vector<1x128xf32> to vector<8x128xf32>
    %34 = arith.addf %31, %33 : vector<8x128xf32>
    %c0_10 = arith.constant 0 : index
    %c0_11 = arith.constant 0 : index
    %35 = vector.load %arg8[%c0_10, %c0_11] : memref<8x128xf32, #tpu.memory_space<vmem>>, vector<8x128xf32>
    tpu.vector_store %arg8[%c0_10, %c0_11], %34 {strides = array<i32>} : memref<8x128xf32, #tpu.memory_space<vmem>>, vector<8x128xf32>,
    return
  }
  func.func @transform_0(%arg0: i32) -> (i32, i32) {
    %c0_i32 = arith.constant 0 : i32
    %c0_i32_0 = arith.constant 0 : i32
    %c0_i32_1 = arith.constant 0 : i32
    return %c0_i32, %c0_i32_0 : i32, i32
  }
  func.func @transform_1(%arg0: i32) -> (i32, i32) {
    %c0_i32 = arith.constant 0 : i32
    %c0_i32_0 = arith.constant 0 : i32
    %c0_i32_1 = arith.constant 0 : i32
    return %c0_i32, %c0_i32_0 : i32, i32
  }
  func.func @transform_2(%arg0: i32) -> (i32, i32) {
    %c0_i32 = arith.constant 0 : i32
    %c0_i32_0 = arith.constant 0 : i32
    %c0_i32_1 = arith.constant 0 : i32
    return %c0_i32, %c0_i32_0 : i32, i32
  }
  func.func @transform_3(%arg0: i32) -> (i32, i32) {
    %c0_i32 = arith.constant 0 : i32
    %c0_i32_0 = arith.constant 0 : i32
    %c0_i32_1 = arith.constant 0 : i32
    return %c0_i32, %c0_i32_0 : i32, i32
  }
  func.func @transform_4(%arg0: i32) -> (i32, i32) {
    %c0_i32 = arith.constant 0 : i32
    %c0_i32_0 = arith.constant 0 : i32
    %c0_i32_1 = arith.constant 0 : i32
    return %c0_i32, %c0_i32_0 : i32, i32
  }
  func.func @transform_5(%arg0: i32) -> (i32, i32) {
    %c0_i32 = arith.constant 0 : i32
    %c0_i32_0 = arith.constant 0 : i32
    %c0_i32_1 = arith.constant 0 : i32
    return %c0_i32, %c0_i32_0 : i32, i32
  }
  func.func @transform_6(%arg0: i32) -> (i32, i32) {
    %c0_i32 = arith.constant 0 : i32
    %c0_i32_0 = arith.constant 0 : i32
    %c0_i32_1 = arith.constant 0 : i32
    return %c0_i32, %c0_i32_0 : i32, i32
  }
  func.func @transform_7(%arg0: i32) -> (i32, i32) {
    %c0_i32 = arith.constant 0 : i32
    %c0_i32_0 = arith.constant 0 : i32
    return %arg0, %c0_i32 : i32, i32
  }
}

</mosaic_0001>

<llo_original>
// kernel: gat_forward.1
$region0: #{gat_forward.1}
  #allocation0 [shape = 'u32[]', space=smem, size = 0x4, offset = 0x4, fixed_abs, tag = 'smem constant byte address 0x4 - core index']
  #allocation1 [shape = 'u32[144,128]{1,0:T(1,128)}', space=vmem, size = 0x12000, scoped, tag = 'internal scratch']
  #allocation2 [shape = 'bf16[16,128]{1,0:T(8,128)(2,1)}', space=vmem, size = 0x1000, scoped, tag = 'scratch operand']
  #allocation3 [shape = 'bf16[16,128]{1,0:T(8,128)(2,1)}', space=vmem, size = 0x1000, scoped, tag = 'scratch operand']
  #allocation4 [shape = 'f32[1,16]{1,0:T(1,128)}', space=vmem, size = 0x200, scoped, tag = 'scratch operand']
  %s0 = inlined_call_operand.vmem [shape: bf16[16,128], index: 0, kind: input, shape index: {}]
  %s1 = inlined_call_operand.vmem [shape: bf16[128,128], index: 1, kind: input, shape index: {}]
  %s2 = inlined_call_operand.vmem [shape: bf16[1,128], index: 2, kind: input, shape index: {}]
  %s3 = inlined_call_operand.vmem [shape: bf16[128,128], index: 3, kind: input, shape index: {}]
  %s4 = inlined_call_operand.vmem [shape: bf16[1,128], index: 4, kind: input, shape index: {}]
  %s5 = inlined_call_operand.vmem [shape: f32[1,128], index: 5, kind: input, shape index: {}]
  %s6 = inlined_call_operand.vmem [shape: bf16[16,16], index: 6, kind: input, shape index: {}]
  %s7 = inlined_call_operand.vmem [shape: f32[16,128], index: 7, kind: output, shape index: {}]
  %s8 = sld [smem:[#allocation0]]
  $region65: #{gat_forward.1} parent=0
    _
  %s10 = ssub.s32 1, %s8
  %s11 = scalar_select 0, %s10, %s8
  loop: start=0, step=1, limit=4
  $region2: #{gat_forward.1} parent=0 // loop_pre_header
    _
  $region3: #{gat_forward.1} parent=0 // loop_header
    %s13 = sphi 0, %s17
    %p14 = scmp.ge.s32.totalorder %s13, 4
    %s21 = sphi 0, %s21
    %s23 = sphi 0, %s21
    %s24 = sphi 0, %s23
    %s38 = sphi 0, %s24
    %s42 = sphi 0, %s42
    %s44 = sphi 0, %s42
    %s45 = sphi 0, %s44
    %s59 = sphi 0, %s45
    %s63 = sphi 0, %s63
    %s65 = sphi 0, %s63
    %s66 = sphi 0, %s65
    %s80 = sphi 0, %s66
    %s84 = sphi 0, %s84
    %s86 = sphi 0, %s84
    %s87 = sphi 0, %s86
    %s101 = sphi 0, %s87
    %s105 = sphi 0, %s105
    %s107 = sphi 0, %s105
    %s108 = sphi 0, %s107
    %s122 = sphi 0, %s108
    %s126 = sphi 0, %s126
    %s128 = sphi 0, %s126
    %s129 = sphi 0, %s128
    %s143 = sphi 0, %s129
    %s147 = sphi 0, %s147
    %s149 = sphi 0, %s147
    %s150 = sphi 0, %s149
    %s164 = sphi 0, %s150
    %s170 = sphi 0, %s172
    %s173 = sphi 0, %s170
    %s174 = sphi 0, %s173
    %s190 = sphi 0, %s174
  $region4: #{gat_forward.1} parent=0 // loop_header_branch
    %16 = sbr.rel (%p14) target = $region8
  $region5: #{gat_forward.1} parent=0 // loop_body
    %s18 = ssub.s32 %s13, 1
    %s19 = ssub.s32 %s13, 2
    %s20 = sadd.s32 %s13, 1
    %s22 = sadd.s32 %s21, 1
    %p25 = scmp.eq.s32.totalorder %s13, 1
    %p26 = scmp.ne.s32.totalorder %s21, %s23
    %p27 = scmp.eq.s32.totalorder %s13, 0
    %p28 = por %p26, %p27
    %p29 = scmp.ne.s32.totalorder %s21, %s23
    %p30 = scmp.eq.s32.totalorder %s18, 1
    %p31 = por %p29, %p30
    %p32 = scmp.ne.s32.totalorder %s23, %s24
    %p33 = scmp.eq.s32.totalorder %s18, 0
    %p34 = por %p32, %p33
    %p35 = scmp.ne.s32.totalorder %s23, %s24
    %p36 = scmp.eq.s32.totalorder %s19, 1
    %p37 = por %p35, %p36
    %p39 = scmp.ne.s32.totalorder %s24, %s38
    %p40 = scmp.eq.s32.totalorder %s19, 0
    %p41 = por %p39, %p40
    %s43 = sadd.s32 %s42, 1
    %p46 = scmp.eq.s32.totalorder %s13, 1
    %p47 = scmp.ne.s32.totalorder %s42, %s44
    %p48 = scmp.eq.s32.totalorder %s13, 0
    %p49 = por %p47, %p48
    %p50 = scmp.ne.s32.totalorder %s42, %s44
    %p51 = scmp.eq.s32.totalorder %s18, 1
    %p52 = por %p50, %p51
    %p53 = scmp.ne.s32.totalorder %s44, %s45
    %p54 = scmp.eq.s32.totalorder %s18, 0
    %p55 = por %p53, %p54
    %p56 = scmp.ne.s32.totalorder %s44, %s45
    %p57 = scmp.eq.s32.totalorder %s19, 1
    %p58 = por %p56, %p57
    %p60 = scmp.ne.s32.totalorder %s45, %s59
    %p61 = scmp.eq.s32.totalorder %s19, 0
    %p62 = por %p60, %p61
    %s64 = sadd.s32 %s63, 1
    %p67 = scmp.eq.s32.totalorder %s13, 1
    %p68 = scmp.ne.s32.totalorder %s63, %s65
    %p69 = scmp.eq.s32.totalorder %s13, 0
    %p70 = por %p68, %p69
    %p71 = scmp.ne.s32.totalorder %s63, %s65
    %p72 = scmp.eq.s32.totalorder %s18, 1
    %p73 = por %p71, %p72
    %p74 = scmp.ne.s32.totalorder %s65, %s66
    %p75 = scmp.eq.s32.totalorder %s18, 0
    %p76 = por %p74, %p75
    %p77 = scmp.ne.s32.totalorder %s65, %s66
    %p78 = scmp.eq.s32.totalorder %s19, 1
    %p79 = por %p77, %p78
    %p81 = scmp.ne.s32.totalorder %s66, %s80
    %p82 = scmp.eq.s32.totalorder %s19, 0
    %p83 = por %p81, %p82
    %s85 = sadd.s32 %s84, 1
    %p88 = scmp.eq.s32.totalorder %s13, 1
    %p89 = scmp.ne.s32.totalorder %s84, %s86
    %p90 = scmp.eq.s32.totalorder %s13, 0
    %p91 = por %p89, %p90
    %p92 = scmp.ne.s32.totalorder %s84, %s86
    %p93 = scmp.eq.s32.totalorder %s18, 1
    %p94 = por %p92, %p93
    %p95 = scmp.ne.s32.totalorder %s86, %s87
    %p96 = scmp.eq.s32.totalorder %s18, 0
    %p97 = por %p95, %p96
    %p98 = scmp.ne.s32.totalorder %s86, %s87
    %p99 = scmp.eq.s32.totalorder %s19, 1
    %p100 = por %p98, %p99
    %p102 = scmp.ne.s32.totalorder %s87, %s101
    %p103 = scmp.eq.s32.totalorder %s19, 0
    %p104 = por %p102, %p103
    %s106 = sadd.s32 %s105, 1
    %p109 = scmp.eq.s32.totalorder %s13, 1
    %p110 = scmp.ne.s32.totalorder %s105, %s107
    %p111 = scmp.eq.s32.totalorder %s13, 0
    %p112 = por %p110, %p111
    %p113 = scmp.ne.s32.totalorder %s105, %s107
    %p114 = scmp.eq.s32.totalorder %s18, 1
    %p115 = por %p113, %p114
    %p116 = scmp.ne.s32.totalorder %s107, %s108
    %p117 = scmp.eq.s32.totalorder %s18, 0
    %p118 = por %p116, %p117
    %p119 = scmp.ne.s32.totalorder %s107, %s108
    %p120 = scmp.eq.s32.totalorder %s19, 1
    %p121 = por %p119, %p120
    %p123 = scmp.ne.s32.totalorder %s108, %s122
    %p124 = scmp.eq.s32.totalorder %s19, 0
    %p125 = por %p123, %p124
    %s127 = sadd.s32 %s126, 1
    %p130 = scmp.eq.s32.totalorder %s13, 1
    %p131 = scmp.ne.s32.totalorder %s126, %s128
    %p132 = scmp.eq.s32.totalorder %s13, 0
    %p133 = por %p131, %p132
    %p134 = scmp.ne.s32.totalorder %s126, %s128
    %p135 = scmp.eq.s32.totalorder %s18, 1
    %p136 = por %p134, %p135
    %p137 = scmp.ne.s32.totalorder %s128, %s129
    %p138 = scmp.eq.s32.totalorder %s18, 0
    %p139 = por %p137, %p138
    %p140 = scmp.ne.s32.totalorder %s128, %s129
    %p141 = scmp.eq.s32.totalorder %s19, 1
    %p142 = por %p140, %p141
    %p144 = scmp.ne.s32.totalorder %s129, %s143
    %p145 = scmp.eq.s32.totalorder %s19, 0
    %p146 = por %p144, %p145
    %s148 = sadd.s32 %s147, 1
    %p151 = scmp.eq.s32.totalorder %s13, 1
    %p152 = scmp.ne.s32.totalorder %s147, %s149
    %p153 = scmp.eq.s32.totalorder %s13, 0
    %p154 = por %p152, %p153
    %p155 = scmp.ne.s32.totalorder %s147, %s149
    %p156 = scmp.eq.s32.totalorder %s18, 1
    %p157 = por %p155, %p156
    %p158 = scmp.ne.s32.totalorder %s149, %s150
    %p159 = scmp.eq.s32.totalorder %s18, 0
    %p160 = por %p158, %p159
    %p161 = scmp.ne.s32.totalorder %s149, %s150
    %p162 = scmp.eq.s32.totalorder %s19, 1
    %p163 = por %p161, %p162
    %p165 = scmp.ne.s32.totalorder %s150, %s164
    %p166 = scmp.eq.s32.totalorder %s19, 0
    %p167 = por %p165, %p166
    %s168 = ssub.s32 %s13, %s20
    %p169 = scmp.eq.s32.totalorder %s168, 0
    %s171 = sadd.s32 %s170, 1
    %s172 = scalar_select %p169, %s170, %s171
    %p175 = pneg %p169
    %p176 = scmp.eq.s32.totalorder %s13, 1
    %p177 = por %p175, %p176
    %p178 = scmp.ne.s32.totalorder %s170, %s173
    %p179 = scmp.eq.s32.totalorder %s13, 0
    %p180 = por %p178, %p179
    %p181 = scmp.ne.s32.totalorder %s170, %s173
    %p182 = scmp.eq.s32.totalorder %s18, 1
    %p183 = por %p181, %p182
    %p184 = scmp.ne.s32.totalorder %s173, %s174
    %p185 = scmp.eq.s32.totalorder %s18, 0
    %p186 = por %p184, %p185
    %p187 = scmp.ne.s32.totalorder %s173, %s174
    %p188 = scmp.eq.s32.totalorder %s19, 1
    %p189 = por %p187, %p188
    %p191 = scmp.ne.s32.totalorder %s174, %s190
    %p192 = scmp.eq.s32.totalorder %s19, 0
    %p193 = por %p191, %p192
    %p194 = scmp.le.s32.totalorder 1, %s13
    %p195 = scmp.lt.s32.totalorder %s13, 3
    %p196 = pnand %p194, %p195
    %p197 = pneg %p196
    // Predicated region
    $region9: #{gat_forward.1} parent=5 // pred_check
      _
    $region10: #{gat_forward.1} parent=5 // pred_check_branch
      %199 = sbr.rel (%p196) target = $region12
    $region11: #{gat_forward.1} parent=5 // pred_region
      %s200 = ssub.s32 %s13, 1
      // Predicated region
      $region13: #{gat_forward.1} parent=11 // pred_check
        %p201 = pneg %p34
      $region14: #{gat_forward.1} parent=11 // pred_check_branch
        %203 = sbr.rel (%p201) target = $region16
      $region15: #{gat_forward.1} parent=11 // pred_region
        _
      $region16: #{gat_forward.1} parent=11 // pred_fallthru
        _
      // Predicated region
      $region17: #{gat_forward.1} parent=11 // pred_check
        %p204 = pneg %p55
      $region18: #{gat_forward.1} parent=11 // pred_check_branch
        %206 = sbr.rel (%p204) target = $region20
      $region19: #{gat_forward.1} parent=11 // pred_region
        _
      $region20: #{gat_forward.1} parent=11 // pred_fallthru
        _
      // Predicated region
      $region21: #{gat_forward.1} parent=11 // pred_check
        %p207 = pneg %p76
      $region22: #{gat_forward.1} parent=11 // pred_check_branch
        %209 = sbr.rel (%p207) target = $region24
      $region23: #{gat_forward.1} parent=11 // pred_region
        _
      $region24: #{gat_forward.1} parent=11 // pred_fallthru
        _
      // Predicated region
      $region25: #{gat_forward.1} parent=11 // pred_check
        %p210 = pneg %p97
      $region26: #{gat_forward.1} parent=11 // pred_check_branch
        %212 = sbr.rel (%p210) target = $region28
      $region27: #{gat_forward.1} parent=11 // pred_region
        _
      $region28: #{gat_forward.1} parent=11 // pred_fallthru
        _
      // Predicated region
      $region29: #{gat_forward.1} parent=11 // pred_check
        %p213 = pneg %p118
      $region30: #{gat_forward.1} parent=11 // pred_check_branch
        %215 = sbr.rel (%p213) target = $region32
      $region31: #{gat_forward.1} parent=11 // pred_region
        _
      $region32: #{gat_forward.1} parent=11 // pred_fallthru
        _
      // Predicated region
      $region33: #{gat_forward.1} parent=11 // pred_check
        %p216 = pneg %p139
      $region34: #{gat_forward.1} parent=11 // pred_check_branch
        %218 = sbr.rel (%p216) target = $region36
      $region35: #{gat_forward.1} parent=11 // pred_region
        _
      $region36: #{gat_forward.1} parent=11 // pred_fallthru
        _
      // Predicated region
      $region37: #{gat_forward.1} parent=11 // pred_check
        %p219 = pneg %p160
      $region38: #{gat_forward.1} parent=11 // pred_check_branch
        %221 = sbr.rel (%p219) target = $region40
      $region39: #{gat_forward.1} parent=11 // pred_region
        _
      $region40: #{gat_forward.1} parent=11 // pred_fallthru
        _
    $region12: #{gat_forward.1} parent=5 // pred_fallthru
      _
    %p222 = scmp.lt.s32.totalorder %s13, 2
    // Predicated region
    $region41: #{gat_forward.1} parent=5 // pred_check
      %p223 = pneg %p222
    $region42: #{gat_forward.1} parent=5 // pred_check_branch
      %225 = sbr.rel (%p223) target = $region44
    $region43: #{gat_forward.1} parent=5 // pred_region
      _
    $region44: #{gat_forward.1} parent=5 // pred_fallthru
      _
    %p226 = scmp.le.s32.totalorder 1, %s13
    %p227 = scmp.lt.s32.totalorder %s13, 3
    %p228 = pnand %p226, %p227
    %p229 = pneg %p228
    // Predicated region
    $region45: #{gat_forward.1} parent=5 // pred_check
      _
    $region46: #{gat_forward.1} parent=5 // pred_check_branch
      %231 = sbr.rel (%p228) target = $region48
    $region47: #{gat_forward.1} parent=5 // pred_region
      %s232 = ssub.s32 %s13, 1
      %p233 = pneg %p34
      %p234 = pneg %p31
      %p235 = pneg %p55
      %p236 = pneg %p52
      %p237 = pneg %p76
      %p238 = pneg %p73
      %p239 = pneg %p97
      %p240 = pneg %p94
      %p241 = pneg %p118
      %p242 = pneg %p115
      %p243 = pneg %p139
      %p244 = pneg %p136
      %p245 = pneg %p160
      %p246 = pneg %p157
      %p247 = pneg %p186
      %p248 = pneg %p183
      %p249 = scmp.lt.s32.totalorder %s18, 1
      %s250 = scalar_select %p249, %s18, 1
      %s251 = smul.addr %s250, 8
      %s252 = scalar_lea.vmem %s7, %s251
      %p253 = scmp.lt.s32.totalorder %s18, 1
      %s254 = scalar_select %p253, %s18, 1
      %s255 = smul.addr %s254, 8
      %s256 = scalar_lea.vmem %s7, %s255
      %p258 = scmp.eq.s32.totalorder %s18, 0
      // Predicated region
      $region49: #{gat_forward.1} parent=47 // pred_check
        %p259 = pneg %p258
      $region50: #{gat_forward.1} parent=47 // pred_check_branch
        %261 = sbr.rel (%p259) target = $region52
      $region51: #{gat_forward.1} parent=47 // pred_region
        %v262 = vld [vmem:[%s0] sm:$0xf]
        %v263 = vld [vmem:[%s0 + $0x4] sm:$0xf]
        %v264 = vld [vmem:[%s1] sm:$0xf]
        %v265 = vld [vmem:[%s1 + $0x4] sm:$0xf]
        %v266 = vld [vmem:[%s1 + $0x8] sm:$0xf]
        %v267 = vld [vmem:[%s1 + $0xc] sm:$0xf]
        %v268 = vld [vmem:[%s1 + $0x10] sm:$0xf]
        %v269 = vld [vmem:[%s1 + $0x14] sm:$0xf]
        %v270 = vld [vmem:[%s1 + $0x18] sm:$0xf]
        %v271 = vld [vmem:[%s1 + $0x1c] sm:$0xf]
        %v272 = vld [vmem:[%s1 + $0x20] sm:$0xf]
        %v273 = vld [vmem:[%s1 + $0x24] sm:$0xf]
        %v274 = vld [vmem:[%s1 + $0x28] sm:$0xf]
        %v275 = vld [vmem:[%s1 + $0x2c] sm:$0xf]
        %v276 = vld [vmem:[%s1 + $0x30] sm:$0xf]
        %v277 = vld [vmem:[%s1 + $0x34] sm:$0xf]
        %v278 = vld [vmem:[%s1 + $0x38] sm:$0xf]
        %v279 = vld [vmem:[%s1 + $0x3c] sm:$0xf]
        %v282 = vunpack.c.l.b16 %v262
        %v283 = vunpack.c.l.b16 %v263
        %v284 = vpack.c.b16 %v283, %v282
        %v302 = vunpack.c.l.b16 %v264
        %v303 = vunpack.c.l.b16 %v265
        %v304 = vunpack.c.l.b16 %v266
        %v305 = vunpack.c.l.b16 %v267
        %v306 = vunpack.c.l.b16 %v268
        %v307 = vunpack.c.l.b16 %v269
        %v308 = vunpack.c.l.b16 %v270
        %v309 = vunpack.c.l.b16 %v271
        %v310 = vunpack.c.l.b16 %v272
        %v311 = vunpack.c.l.b16 %v273
        %v312 = vunpack.c.l.b16 %v274
        %v313 = vunpack.c.l.b16 %v275
        %v314 = vunpack.c.l.b16 %v276
        %v315 = vunpack.c.l.b16 %v277
        %v316 = vunpack.c.l.b16 %v278
        %v317 = vunpack.c.l.b16 %v279
        %v318 = vpack.c.b16 %v303, %v302
        %v319 = vpack.c.b16 %v305, %v304
        %v320 = vpack.c.b16 %v307, %v306
        %v321 = vpack.c.b16 %v309, %v308
        %v322 = vpack.c.b16 %v311, %v310
        %v323 = vpack.c.b16 %v313, %v312
        %v324 = vpack.c.b16 %v315, %v314
        %v325 = vpack.c.b16 %v317, %v316
        %334 = vmatprep.subr.bf16.mxu0 0
        %335 = vmatpush1.bf16.msra.mxu0 %v325
        %336 = vmatprep.subr.bf16.mxu0 0
        %337 = vmatpush1.bf16.msra.mxu0 %v324
        %338 = vmatprep.subr.bf16.mxu0 0
        %339 = vmatpush1.bf16.msra.mxu0 %v323
        %340 = vmatprep.subr.bf16.mxu0 0
        %341 = vmatpush1.bf16.msra.mxu0 %v322
        %342 = vmatprep.subr.bf16.mxu0 0
        %343 = vmatpush1.bf16.msra.mxu0 %v321
        %344 = vmatprep.subr.bf16.mxu0 0
        %345 = vmatpush1.bf16.msra.mxu0 %v320
        %346 = vmatprep.subr.bf16.mxu0 0
        %347 = vmatpush1.bf16.msra.mxu0 %v319
        %348 = vmatprep.subr.bf16.mxu0 0
        %349 = vmatpush1.bf16.msra.mxu0 %v318
        %350 = vmatprep.subr.bf16.mxu0 0
        %351 = vmatpush2.bf16.msra.mxu0 0
        %352 = vmatprep.subr.bf16.mxu0 0
        %353 = vmatpush2.bf16.msra.mxu0 0
        %354 = vmatprep.subr.bf16.mxu0 0
        %355 = vmatpush2.bf16.msra.mxu0 0
        %356 = vmatprep.subr.bf16.mxu0 0
        %357 = vmatpush2.bf16.msra.mxu0 0
        %358 = vmatprep.subr.bf16.mxu0 0
        %359 = vmatpush2.bf16.msra.mxu0 0
        %360 = vmatprep.subr.bf16.mxu0 0
        %361 = vmatpush2.bf16.msra.mxu0 0
        %362 = vmatprep.subr.bf16.mxu0 0
        %363 = vmatpush2.bf16.msra.mxu0 0
        %364 = vmatprep.subr.bf16.mxu0 0
        %365 = vmatpush2.bf16.msra.mxu0 0
        %366 = vmatprep.mubr.bf16.mxu0 0
        %367 = vmatmul.mubr.bf16.gmra.mxu0 %v284
        %v368 = vpop.f32.mrf.mxu0
        %v369 = vadd.f32 0.0, %v368
        %v370 = vpop.f32.mrf.mxu0
        %v371 = vpop.f32.mrf.mxu0
        %v372 = vadd.f32 0.0, %v371
        %v373 = vpop.f32.mrf.mxu0
        %374 = vdwg.mxu0
        %v375 = vpack.c.bf16 %v372, %v369
        %v377 = vunpack.c.l.b16 %v375
        %v378 = vunpack.c.h.b16 %v375
        %v379 = vpack.c.b16 %v377, %v377
        %v380 = vpack.c.b16 %v378, %v378
        %383 = vst [vmem:[#allocation2] sm:$0xf] %v379
        %384 = vst [vmem:[#allocation2 + $0x4] sm:$0xf] %v380
        %v385 = vld [vmem:[%s2] sm:$0x1]
        %386 = vmatprep.subr.bf16.mxu0 0
        %387 = vmatpush1.bf16.xpose.msra.mxu0 0
        %388 = vmatprep.subr.bf16.mxu0 0
        %389 = vmatpush1.bf16.xpose.msra.mxu0 0
        %390 = vmatprep.subr.bf16.mxu0 0
        %391 = vmatpush1.bf16.xpose.msra.mxu0 0
        %392 = vmatprep.subr.bf16.mxu0 0
        %393 = vmatpush1.bf16.xpose.msra.mxu0 0
        %394 = vmatprep.subr.bf16.mxu0 0
        %395 = vmatpush1.bf16.xpose.msra.mxu0 0
        %396 = vmatprep.subr.bf16.mxu0 0
        %397 = vmatpush1.bf16.xpose.msra.mxu0 0
        %398 = vmatprep.subr.bf16.mxu0 0
        %399 = vmatpush1.bf16.xpose.msra.mxu0 0
        %400 = vmatprep.subr.bf16.mxu0 0
        %401 = vmatpush1.bf16.xpose.msra.mxu0 %v284
        %402 = vmatprep.subr.bf16.mxu0 0
        %403 = vmatpush2.bf16.xpose.msra.mxu0 0
        %404 = vmatprep.subr.bf16.mxu0 0
        %405 = vmatpush2.bf16.xpose.msra.mxu0 0
        %406 = vmatprep.subr.bf16.mxu0 0
        %407 = vmatpush2.bf16.xpose.msra.mxu0 0
        %408 = vmatprep.subr.bf16.mxu0 0
        %409 = vmatpush2.bf16.xpose.msra.mxu0 0
        %410 = vmatprep.subr.bf16.mxu0 0
        %411 = vmatpush2.bf16.xpose.msra.mxu0 0
        %412 = vmatprep.subr.bf16.mxu0 0
        %413 = vmatpush2.bf16.xpose.msra.mxu0 0
        %414 = vmatprep.subr.bf16.mxu0 0
        %415 = vmatpush2.bf16.xpose.msra.mxu0 0
        %416 = vmatprep.subr.bf16.mxu0 0
        %417 = vmatpush2.bf16.xpose.msra.mxu0 0
        %418 = vmatprep.mubr.bf16.mxu0 0
        %419 = vmatmul.mubr.bf16.gmra.mxu0 %v385
        %v420 = vpop.f32.mrf.mxu0
        %v421 = vadd.f32 0.0, %v420
        %v422 = vpop.f32.mrf.mxu0
        %v423 = vpop.f32.mrf.mxu0
        %v424 = vpop.f32.mrf.mxu0
        %425 = vdwg.mxu0
        %v426 = vld [vmem:[#allocation2] sm:$0xf]
        %v427 = vunpack.c.l.bf16 %v426
        %v428 = vld [vmem:[%s6] sm:$0xf]
        %v429 = vld [vmem:[#allocation2] sm:$0xf]
        %v430 = vld [vmem:[#allocation2 + $0x4] sm:$0xf]
        %432 = vset.pattern.permute.xlu0 127
        %433 = vperm.xlu0 %432, %v427
        %v434 = vpop.permute.xlu0 %433
        %v436 = vlaneseq
        %v437 = vshrl.u32 %v436, 7
        %v438 = vsub.s32 0, %v437
        %v439 = vrot.slane %v421, %v438
        %v440 = vadd.f32 %v434, %v439
        %v441 = vmul.f32 %v440, 0.2
        %v442 = vmax.f32 %v440, %v441
        %v443 = vunpack.c.l.bf16 %v428
        %v444 = vadd.f32 %v442, %v443
        %vm445 = vcmask 130048
        %v446 = vsel %vm445, %v444, -inf
        %447 = vmax.xlane.f32.xlu0 %v446
        %v448 = vpop.xlane.xlu0 %447
        %v449 = vsub.f32 %v444, %v448
        %v450 = vmul.f32 %v449, 1.442695
        %v451 = vpow.pop %v450
        %v452 = vsel %vm445, %v451, 0.0
        %453 = vadd.xlane.f32.xlu0 %v452
        %v454 = vpop.xlane.xlu0 %453
        %v455 = vrcp.pop %v454
        %v456 = vmul.f32 %v451, %v455
        %v457 = vpack.c.bf16 %v456, %v456
        %v460 = vunpack.c.l.b16 %v429
        %v461 = vunpack.c.l.b16 %v430
        %v462 = vpack.c.b16 %v461, %v460
        %v465 = vsel %vm445, %v457, 0
        %467 = vmatprep.subr.bf16.mxu0 0
        %468 = vmatpush1.bf16.msra.mxu0 0
        %469 = vmatprep.subr.bf16.mxu0 0
        %470 = vmatpush1.bf16.msra.mxu0 0
        %471 = vmatprep.subr.bf16.mxu0 0
        %472 = vmatpush1.bf16.msra.mxu0 0
        %473 = vmatprep.subr.bf16.mxu0 0
        %474 = vmatpush1.bf16.msra.mxu0 0
        %475 = vmatprep.subr.bf16.mxu0 0
        %476 = vmatpush1.bf16.msra.mxu0 0
        %477 = vmatprep.subr.bf16.mxu0 0
        %478 = vmatpush1.bf16.msra.mxu0 0
        %479 = vmatprep.subr.bf16.mxu0 0
        %480 = vmatpush1.bf16.msra.mxu0 0
        %481 = vmatprep.subr.bf16.mxu0 0
        %482 = vmatpush1.bf16.msra.mxu0 %v462
        %483 = vmatprep.subr.bf16.mxu0 0
        %484 = vmatpush2.bf16.msra.mxu0 0
        %485 = vmatprep.subr.bf16.mxu0 0
        %486 = vmatpush2.bf16.msra.mxu0 0
        %487 = vmatprep.subr.bf16.mxu0 0
        %488 = vmatpush2.bf16.msra.mxu0 0
        %489 = vmatprep.subr.bf16.mxu0 0
        %490 = vmatpush2.bf16.msra.mxu0 0
        %491 = vmatprep.subr.bf16.mxu0 0
        %492 = vmatpush2.bf16.msra.mxu0 0
        %493 = vmatprep.subr.bf16.mxu0 0
        %494 = vmatpush2.bf16.msra.mxu0 0
        %495 = vmatprep.subr.bf16.mxu0 0
        %496 = vmatpush2.bf16.msra.mxu0 0
        %497 = vmatprep.subr.bf16.mxu0 0
        %498 = vmatpush2.bf16.msra.mxu0 0
        %499 = vmatprep.mubr.bf16.mxu0 0
        %500 = vmatmul.mubr.bf16.gmra.mxu0 %v465
        %v501 = vpop.f32.mrf.mxu0
        %v502 = vadd.f32 0.0, %v501
        %v503 = vpop.f32.mrf.mxu0
        %v504 = vpop.f32.mrf.mxu0
        %v505 = vpop.f32.mrf.mxu0
        %506 = vdwg.mxu0
        %v507 = vmax.f32 %v502, 0.0
        %v508 = vpack.c.bf16 %v507, %v507
        %v509 = vld [vmem:[%s3] sm:$0xf]
        %v510 = vld [vmem:[%s3 + $0x4] sm:$0xf]
        %v511 = vld [vmem:[%s3 + $0x8] sm:$0xf]
        %v512 = vld [vmem:[%s3 + $0xc] sm:$0xf]
        %v513 = vld [vmem:[%s3 + $0x10] sm:$0xf]
        %v514 = vld [vmem:[%s3 + $0x14] sm:$0xf]
        %v515 = vld [vmem:[%s3 + $0x18] sm:$0xf]
        %v516 = vld [vmem:[%s3 + $0x1c] sm:$0xf]
        %v517 = vld [vmem:[%s3 + $0x20] sm:$0xf]
        %v518 = vld [vmem:[%s3 + $0x24] sm:$0xf]
        %v519 = vld [vmem:[%s3 + $0x28] sm:$0xf]
        %v520 = vld [vmem:[%s3 + $0x2c] sm:$0xf]
        %v521 = vld [vmem:[%s3 + $0x30] sm:$0xf]
        %v522 = vld [vmem:[%s3 + $0x34] sm:$0xf]
        %v523 = vld [vmem:[%s3 + $0x38] sm:$0xf]
        %v524 = vld [vmem:[%s3 + $0x3c] sm:$0xf]
        %v541 = vunpack.c.l.b16 %v509
        %v542 = vunpack.c.l.b16 %v510
        %v543 = vunpack.c.l.b16 %v511
        %v544 = vunpack.c.l.b16 %v512
        %v545 = vunpack.c.l.b16 %v513
        %v546 = vunpack.c.l.b16 %v514
        %v547 = vunpack.c.l.b16 %v515
        %v548 = vunpack.c.l.b16 %v516
        %v549 = vunpack.c.l.b16 %v517
        %v550 = vunpack.c.l.b16 %v518
        %v551 = vunpack.c.l.b16 %v519
        %v552 = vunpack.c.l.b16 %v520
        %v553 = vunpack.c.l.b16 %v521
        %v554 = vunpack.c.l.b16 %v522
        %v555 = vunpack.c.l.b16 %v523
        %v556 = vunpack.c.l.b16 %v524
        %v557 = vpack.c.b16 %v542, %v541
        %v558 = vpack.c.b16 %v544, %v543
        %v559 = vpack.c.b16 %v546, %v545
        %v560 = vpack.c.b16 %v548, %v547
        %v561 = vpack.c.b16 %v550, %v549
        %v562 = vpack.c.b16 %v552, %v551
        %v563 = vpack.c.b16 %v554, %v553
        %v564 = vpack.c.b16 %v556, %v555
        %573 = vmatprep.subr.bf16.mxu0 0
        %574 = vmatpush1.bf16.msra.mxu0 %v564
        %575 = vmatprep.subr.bf16.mxu0 0
        %576 = vmatpush1.bf16.msra.mxu0 %v563
        %577 = vmatprep.subr.bf16.mxu0 0
        %578 = vmatpush1.bf16.msra.mxu0 %v562
        %579 = vmatprep.subr.bf16.mxu0 0
        %580 = vmatpush1.bf16.msra.mxu0 %v561
        %581 = vmatprep.subr.bf16.mxu0 0
        %582 = vmatpush1.bf16.msra.mxu0 %v560
        %583 = vmatprep.subr.bf16.mxu0 0
        %584 = vmatpush1.bf16.msra.mxu0 %v559
        %585 = vmatprep.subr.bf16.mxu0 0
        %586 = vmatpush1.bf16.msra.mxu0 %v558
        %587 = vmatprep.subr.bf16.mxu0 0
        %588 = vmatpush1.bf16.msra.mxu0 %v557
        %589 = vmatprep.subr.bf16.mxu0 0
        %590 = vmatpush2.bf16.msra.mxu0 0
        %591 = vmatprep.subr.bf16.mxu0 0
        %592 = vmatpush2.bf16.msra.mxu0 0
        %593 = vmatprep.subr.bf16.mxu0 0
        %594 = vmatpush2.bf16.msra.mxu0 0
        %595 = vmatprep.subr.bf16.mxu0 0
        %596 = vmatpush2.bf16.msra.mxu0 0
        %597 = vmatprep.subr.bf16.mxu0 0
        %598 = vmatpush2.bf16.msra.mxu0 0
        %599 = vmatprep.subr.bf16.mxu0 0
        %600 = vmatpush2.bf16.msra.mxu0 0
        %601 = vmatprep.subr.bf16.mxu0 0
        %602 = vmatpush2.bf16.msra.mxu0 0
        %603 = vmatprep.subr.bf16.mxu0 0
        %604 = vmatpush2.bf16.msra.mxu0 0
        %605 = vmatprep.mubr.bf16.mxu0 0
        %606 = vmatmul.mubr.bf16.gmra.mxu0 %v508
        %v607 = vpop.f32.mrf.mxu0
        %v608 = vadd.f32 0.0, %v607
        %v609 = vpop.f32.mrf.mxu0
        %v610 = vpop.f32.mrf.mxu0
        %v611 = vpop.f32.mrf.mxu0
        %612 = vdwg.mxu0
        %v613 = vpack.c.bf16 %v608, %v608
        %614 = vst [vmem:[#allocation3] sm:$0xf] %v613
        %s615 = scalar_lea.vmem [#allocation2], 4
        %v616 = vld [vmem:[%s615] sm:$0xf]
        %v617 = vunpack.c.l.bf16 %v616
        %s618 = scalar_lea.vmem %s6, 4
        %v619 = vld [vmem:[%s618] sm:$0xf]
        %v620 = vld [vmem:[#allocation2] sm:$0xf]
        %v621 = vld [vmem:[#allocation2 + $0x4] sm:$0xf]
        %623 = vset.pattern.permute.xlu0 127
        %624 = vperm.xlu0 %623, %v617
        %v625 = vpop.permute.xlu0 %624
        %v627 = vadd.f32 %v625, %v439
        %v628 = vmul.f32 %v627, 0.2
        %v629 = vmax.f32 %v627, %v628
        %v630 = vunpack.c.l.bf16 %v619
        %v631 = vadd.f32 %v629, %v630
        %v632 = vsel %vm445, %v631, -inf
        %633 = vmax.xlane.f32.xlu0 %v632
        %v634 = vpop.xlane.xlu0 %633
        %v635 = vsub.f32 %v631, %v634
        %v636 = vmul.f32 %v635, 1.442695
        %v637 = vpow.pop %v636
        %v638 = vsel %vm445, %v637, 0.0
        %639 = vadd.xlane.f32.xlu0 %v638
        %v640 = vpop.xlane.xlu0 %639
        %v641 = vrcp.pop %v640
        %v642 = vmul.f32 %v637, %v641
        %v643 = vpack.c.bf16 %v642, %v642
        %v646 = vunpack.c.l.b16 %v620
        %v647 = vunpack.c.l.b16 %v621
        %v648 = vpack.c.b16 %v647, %v646
        %v651 = vsel %vm445, %v643, 0
        %653 = vmatprep.subr.bf16.mxu0 0
        %654 = vmatpush1.bf16.msra.mxu0 0
        %655 = vmatprep.subr.bf16.mxu0 0
        %656 = vmatpush1.bf16.msra.mxu0 0
        %657 = vmatprep.subr.bf16.mxu0 0
        %658 = vmatpush1.bf16.msra.mxu0 0
        %659 = vmatprep.subr.bf16.mxu0 0
        %660 = vmatpush1.bf16.msra.mxu0 0
        %661 = vmatprep.subr.bf16.mxu0 0
        %662 = vmatpush1.bf16.msra.mxu0 0
        %663 = vmatprep.subr.bf16.mxu0 0
        %664 = vmatpush1.bf16.msra.mxu0 0
        %665 = vmatprep.subr.bf16.mxu0 0
        %666 = vmatpush1.bf16.msra.mxu0 0
        %667 = vmatprep.subr.bf16.mxu0 0
        %668 = vmatpush1.bf16.msra.mxu0 %v648
        %669 = vmatprep.subr.bf16.mxu0 0
        %670 = vmatpush2.bf16.msra.mxu0 0
        %671 = vmatprep.subr.bf16.mxu0 0
        %672 = vmatpush2.bf16.msra.mxu0 0
        %673 = vmatprep.subr.bf16.mxu0 0
        %674 = vmatpush2.bf16.msra.mxu0 0
        %675 = vmatprep.subr.bf16.mxu0 0
        %676 = vmatpush2.bf16.msra.mxu0 0
        %677 = vmatprep.subr.bf16.mxu0 0
        %678 = vmatpush2.bf16.msra.mxu0 0
        %679 = vmatprep.subr.bf16.mxu0 0
        %680 = vmatpush2.bf16.msra.mxu0 0
        %681 = vmatprep.subr.bf16.mxu0 0
        %682 = vmatpush2.bf16.msra.mxu0 0
        %683 = vmatprep.subr.bf16.mxu0 0
        %684 = vmatpush2.bf16.msra.mxu0 0
        %685 = vmatprep.mubr.bf16.mxu0 0
        %686 = vmatmul.mubr.bf16.gmra.mxu0 %v651
        %v687 = vpop.f32.mrf.mxu0
        %v688 = vadd.f32 0.0, %v687
        %v689 = vpop.f32.mrf.mxu0
        %v690 = vpop.f32.mrf.mxu0
        %v691 = vpop.f32.mrf.mxu0
        %692 = vdwg.mxu0
        %v693 = vmax.f32 %v688, 0.0
        %v694 = vpack.c.bf16 %v693, %v693
        %v695 = vld [vmem:[%s3] sm:$0xf]
        %v696 = vld [vmem:[%s3 + $0x4] sm:$0xf]
        %v697 = vld [vmem:[%s3 + $0x8] sm:$0xf]
        %v698 = vld [vmem:[%s3 + $0xc] sm:$0xf]
        %v699 = vld [vmem:[%s3 + $0x10] sm:$0xf]
        %v700 = vld [vmem:[%s3 + $0x14] sm:$0xf]
        %v701 = vld [vmem:[%s3 + $0x18] sm:$0xf]
        %v702 = vld [vmem:[%s3 + $0x1c] sm:$0xf]
        %v703 = vld [vmem:[%s3 + $0x20] sm:$0xf]
        %v704 = vld [vmem:[%s3 + $0x24] sm:$0xf]
        %v705 = vld [vmem:[%s3 + $0x28] sm:$0xf]
        %v706 = vld [vmem:[%s3 + $0x2c] sm:$0xf]
        %v707 = vld [vmem:[%s3 + $0x30] sm:$0xf]
        %v708 = vld [vmem:[%s3 + $0x34] sm:$0xf]
        %v709 = vld [vmem:[%s3 + $0x38] sm:$0xf]
        %v710 = vld [vmem:[%s3 + $0x3c] sm:$0xf]
        %v727 = vunpack.c.l.b16 %v695
        %v728 = vunpack.c.l.b16 %v696
        %v729 = vunpack.c.l.b16 %v697
        %v730 = vunpack.c.l.b16 %v698
        %v731 = vunpack.c.l.b16 %v699
        %v732 = vunpack.c.l.b16 %v700
        %v733 = vunpack.c.l.b16 %v701
        %v734 = vunpack.c.l.b16 %v702
        %v735 = vunpack.c.l.b16 %v703
        %v736 = vunpack.c.l.b16 %v704
        %v737 = vunpack.c.l.b16 %v705
        %v738 = vunpack.c.l.b16 %v706
        %v739 = vunpack.c.l.b16 %v707
        %v740 = vunpack.c.l.b16 %v708
        %v741 = vunpack.c.l.b16 %v709
        %v742 = vunpack.c.l.b16 %v710
        %v743 = vpack.c.b16 %v728, %v727
        %v744 = vpack.c.b16 %v730, %v729
        %v745 = vpack.c.b16 %v732, %v731
        %v746 = vpack.c.b16 %v734, %v733
        %v747 = vpack.c.b16 %v736, %v735
        %v748 = vpack.c.b16 %v738, %v737
        %v749 = vpack.c.b16 %v740, %v739
        %v750 = vpack.c.b16 %v742, %v741
        %759 = vmatprep.subr.bf16.mxu0 0
        %760 = vmatpush1.bf16.msra.mxu0 %v750
        %761 = vmatprep.subr.bf16.mxu0 0
        %762 = vmatpush1.bf16.msra.mxu0 %v749
        %763 = vmatprep.subr.bf16.mxu0 0
        %764 = vmatpush1.bf16.msra.mxu0 %v748
        %765 = vmatprep.subr.bf16.mxu0 0
        %766 = vmatpush1.bf16.msra.mxu0 %v747
        %767 = vmatprep.subr.bf16.mxu0 0
        %768 = vmatpush1.bf16.msra.mxu0 %v746
        %769 = vmatprep.subr.bf16.mxu0 0
        %770 = vmatpush1.bf16.msra.mxu0 %v745
        %771 = vmatprep.subr.bf16.mxu0 0
        %772 = vmatpush1.bf16.msra.mxu0 %v744
        %773 = vmatprep.subr.bf16.mxu0 0
        %774 = vmatpush1.bf16.msra.mxu0 %v743
        %775 = vmatprep.subr.bf16.mxu0 0
        %776 = vmatpush2.bf16.msra.mxu0 0
        %777 = vmatprep.subr.bf16.mxu0 0
        %778 = vmatpush2.bf16.msra.mxu0 0
        %779 = vmatprep.subr.bf16.mxu0 0
        %780 = vmatpush2.bf16.msra.mxu0 0
        %781 = vmatprep.subr.bf16.mxu0 0
        %782 = vmatpush2.bf16.msra.mxu0 0
        %783 = vmatprep.subr.bf16.mxu0 0
        %784 = vmatpush2.bf16.msra.mxu0 0
        %785 = vmatprep.subr.bf16.mxu0 0
        %786 = vmatpush2.bf16.msra.mxu0 0
        %787 = vmatprep.subr.bf16.mxu0 0
        %788 = vmatpush2.bf16.msra.mxu0 0
        %789 = vmatprep.subr.bf16.mxu0 0
        %790 = vmatpush2.bf16.msra.mxu0 0
        %791 = vmatprep.mubr.bf16.mxu0 0
        %792 = vmatmul.mubr.bf16.gmra.mxu0 %v694
        %v793 = vpop.f32.mrf.mxu0
        %v794 = vadd.f32 0.0, %v793
        %v795 = vpop.f32.mrf.mxu0
        %v796 = vpop.f32.mrf.mxu0
        %v797 = vpop.f32.mrf.mxu0
        %798 = vdwg.mxu0
        %v799 = vpack.c.bf16 %v794, %v794
        %s800 = scalar_lea.vmem [#allocation3], 4
        %801 = vst [vmem:[%s800] sm:$0xf] %v799
        %v802 = vld [vmem:[%s4] sm:$0x1]
        %v803 = vld [vmem:[#allocation3] sm:$0xf]
        %v804 = vld [vmem:[#allocation3 + $0x4] sm:$0xf]
        %v807 = vunpack.c.l.b16 %v803
        %v808 = vunpack.c.l.b16 %v804
        %v809 = vpack.c.b16 %v808, %v807
        %811 = vmatprep.subr.bf16.mxu0 0
        %812 = vmatpush1.bf16.xpose.msra.mxu0 0
        %813 = vmatprep.subr.bf16.mxu0 0
        %814 = vmatpush1.bf16.xpose.msra.mxu0 0
        %815 = vmatprep.subr.bf16.mxu0 0
        %816 = vmatpush1.bf16.xpose.msra.mxu0 0
        %817 = vmatprep.subr.bf16.mxu0 0
        %818 = vmatpush1.bf16.xpose.msra.mxu0 0
        %819 = vmatprep.subr.bf16.mxu0 0
        %820 = vmatpush1.bf16.xpose.msra.mxu0 0
        %821 = vmatprep.subr.bf16.mxu0 0
        %822 = vmatpush1.bf16.xpose.msra.mxu0 0
        %823 = vmatprep.subr.bf16.mxu0 0
        %824 = vmatpush1.bf16.xpose.msra.mxu0 0
        %825 = vmatprep.subr.bf16.mxu0 0
        %826 = vmatpush1.bf16.xpose.msra.mxu0 %v809
        %827 = vmatprep.subr.bf16.mxu0 0
        %828 = vmatpush2.bf16.xpose.msra.mxu0 0
        %829 = vmatprep.subr.bf16.mxu0 0
        %830 = vmatpush2.bf16.xpose.msra.mxu0 0
        %831 = vmatprep.subr.bf16.mxu0 0
        %832 = vmatpush2.bf16.xpose.msra.mxu0 0
        %833 = vmatprep.subr.bf16.mxu0 0
        %834 = vmatpush2.bf16.xpose.msra.mxu0 0
        %835 = vmatprep.subr.bf16.mxu0 0
        %836 = vmatpush2.bf16.xpose.msra.mxu0 0
        %837 = vmatprep.subr.bf16.mxu0 0
        %838 = vmatpush2.bf16.xpose.msra.mxu0 0
        %839 = vmatprep.subr.bf16.mxu0 0
        %840 = vmatpush2.bf16.xpose.msra.mxu0 0
        %841 = vmatprep.subr.bf16.mxu0 0
        %842 = vmatpush2.bf16.xpose.msra.mxu0 0
        %843 = vmatprep.mubr.bf16.mxu0 0
        %844 = vmatmul.mubr.bf16.gmra.mxu0 %v802
        %v845 = vpop.f32.mrf.mxu0
        %v846 = vadd.f32 0.0, %v845
        %v847 = vpop.f32.mrf.mxu0
        %v848 = vpop.f32.mrf.mxu0
        %v849 = vpop.f32.mrf.mxu0
        %850 = vdwg.mxu0
        %vm851 = vcmask 122880
        %852 = vst.msk [vmem:[#allocation4] sm:$0x1] %vm851, %v846
      $region52: #{gat_forward.1} parent=47 // pred_fallthru
        _
      %s853 = smul.u32 %s18, 8
      %s854 = sshra.s32 %s853, 3
      %s855 = sand.u32 %s853, 7
      %s856 = smul.addr %s854, 4
      %s857 = scalar_lea.vmem [#allocation3], %s856
      %v858 = vld [vmem:[%s857] sm:$0xf]
      %v859 = vunpack.c.l.bf16 %v858
      %v860 = vld [vmem:[#allocation4] sm:$0x1]
      %s861 = smul.addr %s854, 4
      %s862 = scalar_lea.vmem %s6, %s861
      %v863 = vld [vmem:[%s862] sm:$0xf]
      %v864 = vld [vmem:[#allocation3] sm:$0xf]
      %v865 = vld [vmem:[#allocation3 + $0x4] sm:$0xf]
      %867 = vset.pattern.permute.xlu0 127
      %868 = vperm.xlu0 %867, %v859
      %v869 = vpop.permute.xlu0 %868
      %v872 = vlaneseq
      %v873 = vshrl.u32 %v872, 7
      %v874 = vsub.s32 0, %v873
      %v875 = vrot.slane %v860, %v874
      %v877 = vadd.f32 %v869, %v875
      %v878 = vmul.f32 %v877, 0.2
      %v879 = vmax.f32 %v877, %v878
      %v880 = vunpack.c.l.bf16 %v863
      %v881 = vadd.f32 %v879, %v880
      %vm882 = vcmask 130048
      %v883 = vsel %vm882, %v881, -inf
      %884 = vmax.xlane.f32.xlu0 %v883
      %v885 = vpop.xlane.xlu0 %884
      %v886 = vsub.f32 %v881, %v885
      %v887 = vmul.f32 %v886, 1.442695
      %v888 = vpow.pop %v887
      %v889 = vsel %vm882, %v888, 0.0
      %890 = vadd.xlane.f32.xlu0 %v889
      %v891 = vpop.xlane.xlu0 %890
      %v892 = vrcp.pop %v891
      %v893 = vmul.f32 %v888, %v892
      %v894 = vpack.c.bf16 %v893, %v893
      %v895 = vld [vmem:[%s5] sm:$0x1]
      %v897 = vlaneseq
      %v898 = vshrl.u32 %v897, 7
      %v899 = vsub.s32 0, %v898
      %v900 = vrot.slane %v895, %v899
      %v904 = vunpack.c.l.b16 %v864
      %v905 = vunpack.c.l.b16 %v865
      %v906 = vpack.c.b16 %v905, %v904
      %v909 = vsel %vm882, %v894, 0
      %911 = vmatprep.subr.bf16.mxu0 0
      %912 = vmatpush1.bf16.msra.mxu0 0
      %913 = vmatprep.subr.bf16.mxu0 0
      %914 = vmatpush1.bf16.msra.mxu0 0
      %915 = vmatprep.subr.bf16.mxu0 0
      %916 = vmatpush1.bf16.msra.mxu0 0
      %917 = vmatprep.subr.bf16.mxu0 0
      %918 = vmatpush1.bf16.msra.mxu0 0
      %919 = vmatprep.subr.bf16.mxu0 0
      %920 = vmatpush1.bf16.msra.mxu0 0
      %921 = vmatprep.subr.bf16.mxu0 0
      %922 = vmatpush1.bf16.msra.mxu0 0
      %923 = vmatprep.subr.bf16.mxu0 0
      %924 = vmatpush1.bf16.msra.mxu0 0
      %925 = vmatprep.subr.bf16.mxu0 0
      %926 = vmatpush1.bf16.msra.mxu0 %v906
      %927 = vmatprep.subr.bf16.mxu0 0
      %928 = vmatpush2.bf16.msra.mxu0 0
      %929 = vmatprep.subr.bf16.mxu0 0
      %930 = vmatpush2.bf16.msra.mxu0 0
      %931 = vmatprep.subr.bf16.mxu0 0
      %932 = vmatpush2.bf16.msra.mxu0 0
      %933 = vmatprep.subr.bf16.mxu0 0
      %934 = vmatpush2.bf16.msra.mxu0 0
      %935 = vmatprep.subr.bf16.mxu0 0
      %936 = vmatpush2.bf16.msra.mxu0 0
      %937 = vmatprep.subr.bf16.mxu0 0
      %938 = vmatpush2.bf16.msra.mxu0 0
      %939 = vmatprep.subr.bf16.mxu0 0
      %940 = vmatpush2.bf16.msra.mxu0 0
      %941 = vmatprep.subr.bf16.mxu0 0
      %942 = vmatpush2.bf16.msra.mxu0 0
      %943 = vmatprep.mubr.bf16.mxu0 0
      %944 = vmatmul.mubr.bf16.gmra.mxu0 %v909
      %v945 = vpop.f32.mrf.mxu0
      %v946 = vadd.f32 %v900, %v945
      %v947 = vpop.f32.mrf.mxu0
      %v948 = vpop.f32.mrf.mxu0
      %v949 = vpop.f32.mrf.mxu0
      %950 = vdwg.mxu0
      %951 = vst [vmem:[%s256] sm:$0xff] %v946
      %p952 = scmp.lt.s32.totalorder %s18, 1
      %s953 = scalar_select %p952, %s18, 1
      %s954 = smul.addr %s953, 8
      %s955 = scalar_lea.vmem %s7, %s954
      // Predicated region
      $region53: #{gat_forward.1} parent=47 // pred_check
        %p956 = pneg %p183
      $region54: #{gat_forward.1} parent=47 // pred_check_branch
        %958 = sbr.rel (%p956) target = $region56
      $region55: #{gat_forward.1} parent=47 // pred_region
        _
      $region56: #{gat_forward.1} parent=47 // pred_fallthru
        _
    $region48: #{gat_forward.1} parent=5 // pred_fallthru
      _
    %p959 = scmp.le.s32.totalorder 2, %s13
    // Predicated region
    $region57: #{gat_forward.1} parent=5 // pred_check
      %p960 = pneg %p959
    $region58: #{gat_forward.1} parent=5 // pred_check_branch
      %962 = sbr.rel (%p960) target = $region60
    $region59: #{gat_forward.1} parent=5 // pred_region
      %s963 = ssub.s32 %s13, 2
      // Predicated region
      $region61: #{gat_forward.1} parent=59 // pred_check
        %p964 = pneg %p189
      $region62: #{gat_forward.1} parent=59 // pred_check_branch
        %966 = sbr.rel (%p964) target = $region64
      $region63: #{gat_forward.1} parent=59 // pred_region
        %p967 = scmp.lt.s32.totalorder %s19, 1
        %s968 = scalar_select %p967, %s19, 1
        %s969 = smul.addr %s968, 8
        %s970 = scalar_lea.vmem %s7, %s969
      $region64: #{gat_forward.1} parent=59 // pred_fallthru
        _
    $region60: #{gat_forward.1} parent=5 // pred_fallthru
      _
  $region6: #{gat_forward.1} parent=0 // loop_footer
    %s17 = sadd.s32 1, %s13
  $region7: #{gat_forward.1} parent=0 // loop_footer_branch
    %12 = sbr.rel target = $region3
  $region8: #{gat_forward.1} parent=0 // loop_exit
    _

</llo_original>
